<compile_context>
chip_gen: v6e
topology: v6e:2x2x1
jax: 0.10.0
libtpu: 0.0.40
codegen_flags: <defaults>
</compile_context>

<pallas_src>
import functools

import jax
import jax.numpy as jnp
from jax.experimental import pallas as pl
from jax.experimental.pallas import tpu as pltpu

_LANE_ALIGN = 256    # tile_n multiple of this -> each of the 2 lane chunks is 128-aligned
_MAX_TILE_N = 4096   # big tiles amortize grid-step overhead; per-tile VMEM is tiny
_NUM_CHUNKS = 2      # two independent lane streams -> MXU/EUP/VPU can co-issue


def _sigmoid(z):
    # tanh form of the logistic: single EUP transcendental, identical math.
    return 0.5 * jnp.tanh(0.5 * z) + 0.5


def _generator_kernel(nres, n_chunks, *refs):
    if nres > 1:
        x_ref, small_ref, wmid_ref, blast_ref, out_ref = refs
    else:  # no residual layers -> wmid was never passed (avoids (0,W,W) block)
        x_ref, small_ref, blast_ref, out_ref = refs
        wmid_ref = None

    # x_ref:     (1, TILE_N)        points of this tile (batch on lanes)
    # small_ref: (W, 3 + nres - 1)  cols = [w0 | b0 | wlast | bmid_0 .. bmid_{nres-2}]
    # wmid_ref:  (nres - 1, W, W)   residual weights, torch (out, in) layout
    # blast_ref: (1,) in SMEM       final bias scalar
    # out_ref:   (1, TILE_N)
    tile_n = x_ref.shape[1]
    cn = tile_n // n_chunks

    small = small_ref[...]
    w0 = small[:, 0:1]                  # (W, 1)
    b0 = small[:, 1:2]                  # (W, 1)
    wlast = small[:, 2:3]               # (W, 1)
    blast = blast_ref[0]

    # Linear(1, W): K=1 matmul == broadcasted outer product (pure VPU, f32).
    hs = [
        _sigmoid(w0 * x_ref[:, c * cn:(c + 1) * cn] + b0)   # (W, cn)
        for c in range(n_chunks)
    ]

    # Residual sigmoid blocks (torch layers[1 .. nres-1]; layers[nres] unused).
    # bf16 MXU operands, f32 accumulation and f32 elementwise.  The two lane
    # chunks form independent dependency chains the scheduler can overlap.
    for i in range(nres - 1):
        wi = wmid_ref[i].astype(jnp.bfloat16)                # (W, W), static index
        bi = small[:, 3 + i:4 + i]                           # (W, 1)
        zs = [
            jnp.dot(wi, h.astype(jnp.bfloat16),
                    preferred_element_type=jnp.float32) + bi
            for h in hs
        ]
        hs = [h + _sigmoid(z) for h, z in zip(hs, zs)]

    # Linear(W, 1): sublane reduction -> lane-dense (1, TILE_N) output.
    for c in range(n_chunks):
        out_ref[:, c * cn:(c + 1) * cn] = (
            jnp.sum(wlast * hs[c], axis=0, keepdims=True) + blast)


def _round_up(a, b):
    return ((a + b - 1) // b) * b


def _pick_tile_n(n):
    # As big as possible (amortize per-step overhead) while keeping >= 2 grid
    # steps when n allows, so ("parallel",) can shard across both v7x TCs.
    n_al = _round_up(n, _LANE_ALIGN)
    half = (n_al // 2 // _LANE_ALIGN) * _LANE_ALIGN
    return int(min(_MAX_TILE_N, max(_LANE_ALIGN, half)))


def generator_forward(x, params, nres, *, tile_n=None):
    """x: (N, 1) float32. Returns (N, 1) float32, matching the torch forward."""
    n = x.shape[0]
    if tile_n is None:
        tile_n = _pick_tile_n(n)
    assert tile_n % _LANE_ALIGN == 0
    n_pad = _round_up(n, tile_n)
    width = params["w0"].shape[0]

    # Batch on the lane axis, zero-padded to a tile multiple.
    xt = jnp.zeros((1, n_pad), jnp.float32).at[0, :n].set(
        x[:, 0].astype(jnp.float32))

    # Fuse all thin params into one slab; the never-used layer is never DMA'd.
    small = jnp.concatenate(
        [params["w0"], params["b0"], params["wlast"]]
        + [params["bmid"][i] for i in range(nres - 1)], axis=1
    ).astype(jnp.float32)                                    # (W, 3 + nres - 1)
    blast = params["blast"].reshape(1).astype(jnp.float32)   # scalar -> SMEM

    in_specs = [
        pl.BlockSpec((1, tile_n), lambda i: (0, i)),         # x tile
        pl.BlockSpec(small.shape, lambda i: (0, 0)),         # resident params
    ]
    operands = [xt, small]
    if nres > 1:
        wmid_used = params["wmid"][:nres - 1].astype(jnp.float32)  # (nres-1, W, W)
        in_specs.append(pl.BlockSpec(wmid_used.shape, lambda i: (0, 0, 0)))
        operands.append(wmid_used)
    in_specs.append(pl.BlockSpec(memory_space=pltpu.MemorySpace.SMEM))
    operands.append(blast)

    cost = pl.CostEstimate(
        flops=int(2 * (nres - 1) * width * width * n_pad + 6 * width * n_pad),
        transcendentals=int(nres * width * n_pad),
        bytes_accessed=int(4 * (2 * n_pad + small.size
                                + (nres - 1) * width * width + 1)),
    )

    kernel = functools.partial(_generator_kernel, nres, _NUM_CHUNKS)
    out_t = pl.pallas_call(
        kernel,
        out_shape=jax.ShapeDtypeStruct((1, n_pad), jnp.float32),
        grid=(n_pad // tile_n,),
        in_specs=in_specs,
        out_specs=pl.BlockSpec((1, tile_n), lambda i: (0, i)),
        compiler_params=pltpu.CompilerParams(
            dimension_semantics=("parallel",)),               # 2 TCs on v7x
        cost_estimate=cost,
    )(*operands)

    return out_t[0, :n].reshape(n, 1)


def init_params(key, nres, width):
    """Deterministic init mimicking torch.nn.Linear's U(-1/sqrt(fan_in), ...).

    Weights stored in torch (out, in) layout; biases as (out, 1) columns."""
    keys = jax.random.split(key, 6)

    def unif(k, shape, fan_in):
        bound = 1.0 / jnp.sqrt(jnp.float32(fan_in))
        return jax.random.uniform(k, shape, jnp.float32, -bound, bound)

    return {
        "w0":    unif(keys[0], (width, 1), 1),                # layers[0].weight
        "b0":    unif(keys[1], (width, 1), 1),                # layers[0].bias
        "wmid":  unif(keys[2], (nres, width, width), width),  # layers[1..nres].weight
        "bmid":  unif(keys[3], (nres, width, 1), width),      # layers[1..nres].bias
        "wlast": unif(keys[4], (width, 1), width),            # layers[nres+1].weight^T
        "blast": unif(keys[5], (1, 1), width),                # layers[nres+1].bias
    }


def generator_reference(x, params, nres, *, bf16_matmul=False):
    """Pure-JAX reference of the PyTorch forward (x: (N, 1)).

    bf16_matmul=True mirrors the kernel's bf16 MXU operands (f32 accumulation)."""
    mm = jnp.bfloat16 if bf16_matmul else jnp.float32
    h = jax.nn.sigmoid(x @ params["w0"].T + params["b0"].T)           # (N, W)
    for i in range(1, nres):
        z = jnp.dot(h.astype(mm), params["wmid"][i - 1].T.astype(mm),
                    preferred_element_type=jnp.float32) + params["bmid"][i - 1].T
        h = h + jax.nn.sigmoid(z)
    return h @ params["wlast"] + params["blast"]                      # (N, 1)


if __name__ == "__main__":
    nres, width = 4, 32
    n = 512                       # auto tile_n=256 -> grid of 2 ("parallel" axis)

    key = jax.random.PRNGKey(0)
    k_params, k_x = jax.random.split(key)
    params = init_params(k_params, nres, width)
    x = jax.random.uniform(k_x, (n, 1), jnp.float32)   # e.g. points in [0, 1)

    out = jax.block_until_ready(generator_forward(x, params, nres))
    assert out.shape == (n, 1)

    # Tight check vs a reference that quantizes MXU operands exactly like the kernel.
    ref_bf16 = generator_reference(x, params, nres, bf16_matmul=True)
    assert jnp.allclose(out, ref_bf16, atol=1e-3, rtol=1e-3), \
        "mismatch vs bf16-matmul reference"

    # Loose check vs the exact f32 torch-equivalent forward (bf16 rounding only).
    ref_f32 = generator_reference(x, params, nres)
    assert jnp.allclose(out, ref_f32, atol=5e-2, rtol=2e-2), \
        "mismatch vs f32 reference"

    print("KERNEL_OK")
</pallas_src>

<mosaic_0001>
module attributes {stable_mosaic.version = 11 : i64} {
  func.func @_generator_kernel(%arg0: i32, %arg1: memref<1x256xf32, #tpu.memory_space<vmem>>, %arg2: memref<32x6xf32, #tpu.memory_space<vmem>>, %arg3: memref<3x32x32xf32, #tpu.memory_space<vmem>>, %arg4: memref<1xf32, #tpu.memory_space<smem>>, %arg5: memref<1x256xf32, #tpu.memory_space<vmem>>) attributes {dimension_semantics = [#tpu.dimension_semantics<parallel>], iteration_bounds = array<i64: 2>, scalar_prefetch = 0 : i64, scratch_operands = 0 : i64, tpu.core_type = #tpu.core_type<tc>, window_params = [{transform_indices = @transform_0, window_bounds = array<i64: 1, 256>}, {pipeline_mode = #tpu.pipeline_mode<synchronous>, transform_indices = @transform_1, window_bounds = array<i64: 32, 6>}, {pipeline_mode = #tpu.pipeline_mode<synchronous>, transform_indices = @transform_2, window_bounds = array<i64: 3, 32, 32>}, {transform_indices = @transform_3, window_bounds = array<i64: 1>}, {transform_indices = @transform_4, window_bounds = array<i64: 1, 256>}]} {
    %c0 = arith.constant 0 : index
    %c0_0 = arith.constant 0 : index
    %0 = vector.load %arg2[%c0, %c0_0] : memref<32x6xf32, #tpu.memory_space<vmem>>, vector<32x6xf32>
    %1 = vector.extract_strided_slice %0 {offsets = [0, 0], sizes = [32, 1], strides = [1, 1]} : vector<32x6xf32> to vector<32x1xf32>
    %2 = vector.extract_strided_slice %0 {offsets = [0, 1], sizes = [32, 1], strides = [1, 1]} : vector<32x6xf32> to vector<32x1xf32>
    %3 = vector.extract_strided_slice %0 {offsets = [0, 2], sizes = [32, 1], strides = [1, 1]} : vector<32x6xf32> to vector<32x1xf32>
    %c0_1 = arith.constant 0 : index
    %4 = memref.load %arg4[%c0_1] : memref<1xf32, #tpu.memory_space<smem>>
    %c0_2 = arith.constant 0 : index
    %c0_3 = arith.constant 0 : index
    %5 = vector.load %arg1[%c0_2, %c0_3] : memref<1x256xf32, #tpu.memory_space<vmem>>, vector<1x128xf32>
    %6 = vector.broadcast %1 : vector<32x1xf32> to vector<32x128xf32>
    %7 = vector.broadcast %5 : vector<1x128xf32> to vector<32x128xf32>
    %8 = arith.mulf %6, %7 : vector<32x128xf32>
    %9 = vector.broadcast %2 : vector<32x1xf32> to vector<32x128xf32>
    %10 = arith.addf %8, %9 : vector<32x128xf32>
    %cst = arith.constant 5.000000e-01 : f32
    %11 = vector.broadcast %cst : f32 to vector<32x128xf32>
    %12 = arith.mulf %11, %10 : vector<32x128xf32>
    %13 = math.tanh %12 : vector<32x128xf32>
    %cst_4 = arith.constant 5.000000e-01 : f32
    %14 = vector.broadcast %cst_4 : f32 to vector<32x128xf32>
    %15 = arith.mulf %14, %13 : vector<32x128xf32>
    %cst_5 = arith.constant 5.000000e-01 : f32
    %16 = vector.broadcast %cst_5 : f32 to vector<32x128xf32>
    %17 = arith.addf %15, %16 : vector<32x128xf32>
    %c0_6 = arith.constant 0 : index
    %c128 = arith.constant 128 : index
    %18 = vector.load %arg1[%c0_6, %c128] : memref<1x256xf32, #tpu.memory_space<vmem>>, vector<1x128xf32>
    %19 = vector.broadcast %1 : vector<32x1xf32> to vector<32x128xf32>
    %20 = vector.broadcast %18 : vector<1x128xf32> to vector<32x128xf32>
    %21 = arith.mulf %19, %20 : vector<32x128xf32>
    %22 = vector.broadcast %2 : vector<32x1xf32> to vector<32x128xf32>
    %23 = arith.addf %21, %22 : vector<32x128xf32>
    %cst_7 = arith.constant 5.000000e-01 : f32
    %24 = vector.broadcast %cst_7 : f32 to vector<32x128xf32>
    %25 = arith.mulf %24, %23 : vector<32x128xf32>
    %26 = math.tanh %25 : vector<32x128xf32>
    %cst_8 = arith.constant 5.000000e-01 : f32
    %27 = vector.broadcast %cst_8 : f32 to vector<32x128xf32>
    %28 = arith.mulf %27, %26 : vector<32x128xf32>
    %cst_9 = arith.constant 5.000000e-01 : f32
    %29 = vector.broadcast %cst_9 : f32 to vector<32x128xf32>
    %30 = arith.addf %28, %29 : vector<32x128xf32>
    %c0_10 = arith.constant 0 : index
    %c0_11 = arith.constant 0 : index
    %c0_12 = arith.constant 0 : index
    %31 = vector.load %arg3[%c0_10, %c0_11, %c0_12] : memref<3x32x32xf32, #tpu.memory_space<vmem>>, vector<1x32x32xf32>
    %32 = vector.shape_cast %31 : vector<1x32x32xf32> to vector<32x32xf32>
    %33 = arith.truncf %32 : vector<32x32xf32> to vector<32x32xbf16>
    %34 = vector.extract_strided_slice %0 {offsets = [0, 3], sizes = [32, 1], strides = [1, 1]} : vector<32x6xf32> to vector<32x1xf32>
    %35 = arith.truncf %17 : vector<32x128xf32> to vector<32x128xbf16>
    %cst_13 = arith.constant dense<0.000000e+00> : vector<32x128xf32>
    %36 = tpu.matmul %33, %35, %cst_13 {dimension_numbers = #tpu.dot_dimension_numbers<[1], [0], [0], [1], [0, 0, 1, 1], [], []>} : vector<32x32xbf16>, vector<32x128xbf16>, vector<32x128xf32> -> vector<32x128xf32>
    %37 = vector.broadcast %34 : vector<32x1xf32> to vector<32x128xf32>
    %38 = arith.addf %36, %37 : vector<32x128xf32>
    %39 = arith.truncf %30 : vector<32x128xf32> to vector<32x128xbf16>
    %cst_14 = arith.constant dense<0.000000e+00> : vector<32x128xf32>
    %40 = tpu.matmul %33, %39, %cst_14 {dimension_numbers = #tpu.dot_dimension_numbers<[1], [0], [0], [1], [0, 0, 1, 1], [], []>} : vector<32x32xbf16>, vector<32x128xbf16>, vector<32x128xf32> -> vector<32x128xf32>
    %41 = vector.broadcast %34 : vector<32x1xf32> to vector<32x128xf32>
    %42 = arith.addf %40, %41 : vector<32x128xf32>
    %cst_15 = arith.constant 5.000000e-01 : f32
    %43 = vector.broadcast %cst_15 : f32 to vector<32x128xf32>
    %44 = arith.mulf %43, %38 : vector<32x128xf32>
    %45 = math.tanh %44 : vector<32x128xf32>
    %cst_16 = arith.constant 5.000000e-01 : f32
    %46 = vector.broadcast %cst_16 : f32 to vector<32x128xf32>
    %47 = arith.mulf %46, %45 : vector<32x128xf32>
    %cst_17 = arith.constant 5.000000e-01 : f32
    %48 = vector.broadcast %cst_17 : f32 to vector<32x128xf32>
    %49 = arith.addf %47, %48 : vector<32x128xf32>
    %50 = arith.addf %17, %49 : vector<32x128xf32>
    %cst_18 = arith.constant 5.000000e-01 : f32
    %51 = vector.broadcast %cst_18 : f32 to vector<32x128xf32>
    %52 = arith.mulf %51, %42 : vector<32x128xf32>
    %53 = math.tanh %52 : vector<32x128xf32>
    %cst_19 = arith.constant 5.000000e-01 : f32
    %54 = vector.broadcast %cst_19 : f32 to vector<32x128xf32>
    %55 = arith.mulf %54, %53 : vector<32x128xf32>
    %cst_20 = arith.constant 5.000000e-01 : f32
    %56 = vector.broadcast %cst_20 : f32 to vector<32x128xf32>
    %57 = arith.addf %55, %56 : vector<32x128xf32>
    %58 = arith.addf %30, %57 : vector<32x128xf32>
    %c1 = arith.constant 1 : index
    %c0_21 = arith.constant 0 : index
    %c0_22 = arith.constant 0 : index
    %59 = vector.load %arg3[%c1, %c0_21, %c0_22] : memref<3x32x32xf32, #tpu.memory_space<vmem>>, vector<1x32x32xf32>
    %60 = vector.shape_cast %59 : vector<1x32x32xf32> to vector<32x32xf32>
    %61 = arith.truncf %60 : vector<32x32xf32> to vector<32x32xbf16>
    %62 = vector.extract_strided_slice %0 {offsets = [0, 4], sizes = [32, 1], strides = [1, 1]} : vector<32x6xf32> to vector<32x1xf32>
    %63 = arith.truncf %50 : vector<32x128xf32> to vector<32x128xbf16>
    %cst_23 = arith.constant dense<0.000000e+00> : vector<32x128xf32>
    %64 = tpu.matmul %61, %63, %cst_23 {dimension_numbers = #tpu.dot_dimension_numbers<[1], [0], [0], [1], [0, 0, 1, 1], [], []>} : vector<32x32xbf16>, vector<32x128xbf16>, vector<32x128xf32> -> vector<32x128xf32>
    %65 = vector.broadcast %62 : vector<32x1xf32> to vector<32x128xf32>
    %66 = arith.addf %64, %65 : vector<32x128xf32>
    %67 = arith.truncf %58 : vector<32x128xf32> to vector<32x128xbf16>
    %cst_24 = arith.constant dense<0.000000e+00> : vector<32x128xf32>
    %68 = tpu.matmul %61, %67, %cst_24 {dimension_numbers = #tpu.dot_dimension_numbers<[1], [0], [0], [1], [0, 0, 1, 1], [], []>} : vector<32x32xbf16>, vector<32x128xbf16>, vector<32x128xf32> -> vector<32x128xf32>
    %69 = vector.broadcast %62 : vector<32x1xf32> to vector<32x128xf32>
    %70 = arith.addf %68, %69 : vector<32x128xf32>
    %cst_25 = arith.constant 5.000000e-01 : f32
    %71 = vector.broadcast %cst_25 : f32 to vector<32x128xf32>
    %72 = arith.mulf %71, %66 : vector<32x128xf32>
    %73 = math.tanh %72 : vector<32x128xf32>
    %cst_26 = arith.constant 5.000000e-01 : f32
    %74 = vector.broadcast %cst_26 : f32 to vector<32x128xf32>
    %75 = arith.mulf %74, %73 : vector<32x128xf32>
    %cst_27 = arith.constant 5.000000e-01 : f32
    %76 = vector.broadcast %cst_27 : f32 to vector<32x128xf32>
    %77 = arith.addf %75, %76 : vector<32x128xf32>
    %78 = arith.addf %50, %77 : vector<32x128xf32>
    %cst_28 = arith.constant 5.000000e-01 : f32
    %79 = vector.broadcast %cst_28 : f32 to vector<32x128xf32>
    %80 = arith.mulf %79, %70 : vector<32x128xf32>
    %81 = math.tanh %80 : vector<32x128xf32>
    %cst_29 = arith.constant 5.000000e-01 : f32
    %82 = vector.broadcast %cst_29 : f32 to vector<32x128xf32>
    %83 = arith.mulf %82, %81 : vector<32x128xf32>
    %cst_30 = arith.constant 5.000000e-01 : f32
    %84 = vector.broadcast %cst_30 : f32 to vector<32x128xf32>
    %85 = arith.addf %83, %84 : vector<32x128xf32>
    %86 = arith.addf %58, %85 : vector<32x128xf32>
    %c2 = arith.constant 2 : index
    %c0_31 = arith.constant 0 : index
    %c0_32 = arith.constant 0 : index
    %87 = vector.load %arg3[%c2, %c0_31, %c0_32] : memref<3x32x32xf32, #tpu.memory_space<vmem>>, vector<1x32x32xf32>
    %88 = vector.shape_cast %87 : vector<1x32x32xf32> to vector<32x32xf32>
    %89 = arith.truncf %88 : vector<32x32xf32> to vector<32x32xbf16>
    %90 = vector.extract_strided_slice %0 {offsets = [0, 5], sizes = [32, 1], strides = [1, 1]} : vector<32x6xf32> to vector<32x1xf32>
    %91 = arith.truncf %78 : vector<32x128xf32> to vector<32x128xbf16>
    %cst_33 = arith.constant dense<0.000000e+00> : vector<32x128xf32>
    %92 = tpu.matmul %89, %91, %cst_33 {dimension_numbers = #tpu.dot_dimension_numbers<[1], [0], [0], [1], [0, 0, 1, 1], [], []>} : vector<32x32xbf16>, vector<32x128xbf16>, vector<32x128xf32> -> vector<32x128xf32>
    %93 = vector.broadcast %90 : vector<32x1xf32> to vector<32x128xf32>
    %94 = arith.addf %92, %93 : vector<32x128xf32>
    %95 = arith.truncf %86 : vector<32x128xf32> to vector<32x128xbf16>
    %cst_34 = arith.constant dense<0.000000e+00> : vector<32x128xf32>
    %96 = tpu.matmul %89, %95, %cst_34 {dimension_numbers = #tpu.dot_dimension_numbers<[1], [0], [0], [1], [0, 0, 1, 1], [], []>} : vector<32x32xbf16>, vector<32x128xbf16>, vector<32x128xf32> -> vector<32x128xf32>
    %97 = vector.broadcast %90 : vector<32x1xf32> to vector<32x128xf32>
    %98 = arith.addf %96, %97 : vector<32x128xf32>
    %cst_35 = arith.constant 5.000000e-01 : f32
    %99 = vector.broadcast %cst_35 : f32 to vector<32x128xf32>
    %100 = arith.mulf %99, %94 : vector<32x128xf32>
    %101 = math.tanh %100 : vector<32x128xf32>
    %cst_36 = arith.constant 5.000000e-01 : f32
    %102 = vector.broadcast %cst_36 : f32 to vector<32x128xf32>
    %103 = arith.mulf %102, %101 : vector<32x128xf32>
    %cst_37 = arith.constant 5.000000e-01 : f32
    %104 = vector.broadcast %cst_37 : f32 to vector<32x128xf32>
    %105 = arith.addf %103, %104 : vector<32x128xf32>
    %106 = arith.addf %78, %105 : vector<32x128xf32>
    %cst_38 = arith.constant 5.000000e-01 : f32
    %107 = vector.broadcast %cst_38 : f32 to vector<32x128xf32>
    %108 = arith.mulf %107, %98 : vector<32x128xf32>
    %109 = math.tanh %108 : vector<32x128xf32>
    %cst_39 = arith.constant 5.000000e-01 : f32
    %110 = vector.broadcast %cst_39 : f32 to vector<32x128xf32>
    %111 = arith.mulf %110, %109 : vector<32x128xf32>
    %cst_40 = arith.constant 5.000000e-01 : f32
    %112 = vector.broadcast %cst_40 : f32 to vector<32x128xf32>
    %113 = arith.addf %111, %112 : vector<32x128xf32>
    %114 = arith.addf %86, %113 : vector<32x128xf32>
    %115 = vector.broadcast %3 : vector<32x1xf32> to vector<32x128xf32>
    %116 = arith.mulf %115, %106 : vector<32x128xf32>
    %cst_41 = arith.constant dense<0.000000e+00> : vector<128xf32>
    %117 = vector.multi_reduction <add>, %116, %cst_41 [0] : vector<32x128xf32> to vector<128xf32>
    %118 = vector.shape_cast %117 : vector<128xf32> to vector<1x128xf32>
    %119 = vector.broadcast %4 : f32 to vector<1x128xf32>
    %120 = arith.addf %118, %119 : vector<1x128xf32>
    %c0_42 = arith.constant 0 : index
    %c0_43 = arith.constant 0 : index
    %121 = vector.load %arg5[%c0_42, %c0_43] : memref<1x256xf32, #tpu.memory_space<vmem>>, vector<1x128xf32>
    tpu.vector_store %arg5[%c0_42, %c0_43], %120 {strides = array<i32>} : memref<1x256xf32, #tpu.memory_space<vmem>>, vector<1x128xf32>,
    %122 = vector.broadcast %3 : vector<32x1xf32> to vector<32x128xf32>
    %123 = arith.mulf %122, %114 : vector<32x128xf32>
    %cst_44 = arith.constant dense<0.000000e+00> : vector<128xf32>
    %124 = vector.multi_reduction <add>, %123, %cst_44 [0] : vector<32x128xf32> to vector<128xf32>
    %125 = vector.shape_cast %124 : vector<128xf32> to vector<1x128xf32>
    %126 = vector.broadcast %4 : f32 to vector<1x128xf32>
    %127 = arith.addf %125, %126 : vector<1x128xf32>
    %c0_45 = arith.constant 0 : index
    %c128_46 = arith.constant 128 : index
    %128 = vector.load %arg5[%c0_45, %c128_46] : memref<1x256xf32, #tpu.memory_space<vmem>>, vector<1x128xf32>
    tpu.vector_store %arg5[%c0_45, %c128_46], %127 {strides = array<i32>} : memref<1x256xf32, #tpu.memory_space<vmem>>, vector<1x128xf32>,
    return
  }
  func.func @transform_0(%arg0: i32) -> (i32, i32) {
    %c0_i32 = arith.constant 0 : i32
    %c0_i32_0 = arith.constant 0 : i32
    return %c0_i32, %arg0 : i32, i32
  }
  func.func @transform_1(%arg0: i32) -> (i32, i32) {
    %c0_i32 = arith.constant 0 : i32
    %c0_i32_0 = arith.constant 0 : i32
    %c0_i32_1 = arith.constant 0 : i32
    return %c0_i32, %c0_i32_0 : i32, i32
  }
  func.func @transform_2(%arg0: i32) -> (i32, i32, i32) {
    %c0_i32 = arith.constant 0 : i32
    %c0_i32_0 = arith.constant 0 : i32
    %c0_i32_1 = arith.constant 0 : i32
    %c0_i32_2 = arith.constant 0 : i32
    return %c0_i32, %c0_i32_0, %c0_i32_1 : i32, i32, i32
  }
  func.func @transform_3(%arg0: i32) -> i32 {
    %c0_i32 = arith.constant 0 : i32
    %c0_i32_0 = arith.constant 0 : i32
    return %c0_i32 : i32
  }
  func.func @transform_4(%arg0: i32) -> (i32, i32) {
    %c0_i32 = arith.constant 0 : i32
    %c0_i32_0 = arith.constant 0 : i32
    return %c0_i32, %arg0 : i32, i32
  }
}

</mosaic_0001>

<llo_original>
// kernel: tpu_custom_call.1
$region0: #{tpu_custom_call.1}
  #allocation0 [shape = 'u32[]', space=smem, size = 0x4, offset = 0x4, fixed_abs, tag = 'smem constant byte address 0x4 - core index']
  #allocation1 [shape = 'u32[144,128]{1,0:T(1,128)}', space=vmem, size = 0x12000, scoped, tag = 'internal scratch']
  #allocation2 [shape = 'f32[1]{0:T(128)S(6)}', space=smem, size = 0x200, scoped, tag = 'scoped memory for tpu_custom_call.1']
  %s0 = inlined_call_operand.vmem [shape: f32[1,512], index: 0, kind: input, shape index: {}]
  %s1 = inlined_call_operand.vmem [shape: f32[32,6], index: 1, kind: input, shape index: {}]
  %s2 = inlined_call_operand.hbm [shape: f32[3,32,32], index: 2, kind: input, shape index: {}]
  %s3 = inlined_call_operand.<no memory space> [shape: f32[1], index: 3, kind: input, shape index: {}]
  %s4 = inlined_call_operand.hbm [shape: f32[1,512], index: 4, kind: output, shape index: {}]
  %s5 = sld [smem:[#allocation0]]
  $region53: #{tpu_custom_call.1} parent=0
    _
  %s7 = ssub.s32 1, %s5
  %s8 = scalar_select 0, %s7, %s5
  %9 = sst [smem:[#allocation2]] %s3
  $region1: #{tpu_custom_call.1} parent=0
    #allocation3 [shape = 'u8[49152]{0}', space=vmem, size = 0xc000, scoped, tag = 'input window, operand 2, single buffered']
    #allocation4 [shape = 's32[2]{0}', space=sflag, size = 0x8, scoped, tag = 'scoped memory for tpu_custom_call.1']
    #allocation5 [shape = 's32[2]{0}', space=sflag, size = 0x8, scoped, tag = 'scoped memory for tpu_custom_call.1']
    #allocation6 [shape = 'u8[2048]{0}', space=vmem, size = 0x800, scoped, tag = 'output window, operand 0']
    %10 = vsyncpa [#allocation4], 0
    %11 = vsyncpa [#allocation5], 0
    %s12 = scalar_lea.sflag [#allocation5], 1
    %13 = vsyncpa %s12, 0
    loop: start=0, step=1, limit=4
    $region2: #{tpu_custom_call.1} parent=1 // loop_pre_header
      _
    $region3: #{tpu_custom_call.1} parent=1 // loop_header
      %s15 = sphi 0, %s19
      %p16 = scmp.ge.s32.totalorder %s15, 4
      %s25 = sphi 0, %s27
      %s28 = sphi 0, %s25
      %s29 = sphi 0, %s28
      %s45 = sphi 0, %s29
      %s49 = sphi 0, %s49
      %s51 = sphi 0, %s49
      %s52 = sphi 0, %s51
      %s66 = sphi 0, %s52
      %s70 = sphi 0, %s70
      %s72 = sphi 0, %s70
      %s73 = sphi 0, %s72
      %s87 = sphi 0, %s73
      %s91 = sphi 0, %s91
      %s93 = sphi 0, %s91
      %s94 = sphi 0, %s93
      %s108 = sphi 0, %s94
      %s114 = sphi 0, %s116
      %s117 = sphi 0, %s114
      %s118 = sphi 0, %s117
      %s134 = sphi 0, %s118
    $region4: #{tpu_custom_call.1} parent=1 // loop_header_branch
      %18 = sbr.rel (%p16) target = $region8
    $region5: #{tpu_custom_call.1} parent=1 // loop_body
      %s20 = ssub.s32 %s15, 1
      %s21 = ssub.s32 %s15, 2
      %s22 = sadd.s32 %s15, 1
      %s23 = ssub.s32 %s15, %s22
      %p24 = scmp.eq.s32.totalorder %s23, 0
      %s26 = sadd.s32 %s25, 1
      %s27 = scalar_select %p24, %s25, %s26
      %p30 = pneg %p24
      %p31 = scmp.eq.s32.totalorder %s15, 1
      %p32 = por %p30, %p31
      %p33 = scmp.ne.s32.totalorder %s25, %s28
      %p34 = scmp.eq.s32.totalorder %s15, 0
      %p35 = por %p33, %p34
      %p36 = scmp.ne.s32.totalorder %s25, %s28
      %p37 = scmp.eq.s32.totalorder %s20, 1
      %p38 = por %p36, %p37
      %p39 = scmp.ne.s32.totalorder %s28, %s29
      %p40 = scmp.eq.s32.totalorder %s20, 0
      %p41 = por %p39, %p40
      %p42 = scmp.ne.s32.totalorder %s28, %s29
      %p43 = scmp.eq.s32.totalorder %s21, 1
      %p44 = por %p42, %p43
      %p46 = scmp.ne.s32.totalorder %s29, %s45
      %p47 = scmp.eq.s32.totalorder %s21, 0
      %p48 = por %p46, %p47
      %s50 = sadd.s32 %s49, 1
      %p53 = scmp.eq.s32.totalorder %s15, 1
      %p54 = scmp.ne.s32.totalorder %s49, %s51
      %p55 = scmp.eq.s32.totalorder %s15, 0
      %p56 = por %p54, %p55
      %p57 = scmp.ne.s32.totalorder %s49, %s51
      %p58 = scmp.eq.s32.totalorder %s20, 1
      %p59 = por %p57, %p58
      %p60 = scmp.ne.s32.totalorder %s51, %s52
      %p61 = scmp.eq.s32.totalorder %s20, 0
      %p62 = por %p60, %p61
      %p63 = scmp.ne.s32.totalorder %s51, %s52
      %p64 = scmp.eq.s32.totalorder %s21, 1
      %p65 = por %p63, %p64
      %p67 = scmp.ne.s32.totalorder %s52, %s66
      %p68 = scmp.eq.s32.totalorder %s21, 0
      %p69 = por %p67, %p68
      %s71 = sadd.s32 %s70, 1
      %p74 = scmp.eq.s32.totalorder %s15, 1
      %p75 = scmp.ne.s32.totalorder %s70, %s72
      %p76 = scmp.eq.s32.totalorder %s15, 0
      %p77 = por %p75, %p76
      %p78 = scmp.ne.s32.totalorder %s70, %s72
      %p79 = scmp.eq.s32.totalorder %s20, 1
      %p80 = por %p78, %p79
      %p81 = scmp.ne.s32.totalorder %s72, %s73
      %p82 = scmp.eq.s32.totalorder %s20, 0
      %p83 = por %p81, %p82
      %p84 = scmp.ne.s32.totalorder %s72, %s73
      %p85 = scmp.eq.s32.totalorder %s21, 1
      %p86 = por %p84, %p85
      %p88 = scmp.ne.s32.totalorder %s73, %s87
      %p89 = scmp.eq.s32.totalorder %s21, 0
      %p90 = por %p88, %p89
      %s92 = sadd.s32 %s91, 1
      %p95 = scmp.eq.s32.totalorder %s15, 1
      %p96 = scmp.ne.s32.totalorder %s91, %s93
      %p97 = scmp.eq.s32.totalorder %s15, 0
      %p98 = por %p96, %p97
      %p99 = scmp.ne.s32.totalorder %s91, %s93
      %p100 = scmp.eq.s32.totalorder %s20, 1
      %p101 = por %p99, %p100
      %p102 = scmp.ne.s32.totalorder %s93, %s94
      %p103 = scmp.eq.s32.totalorder %s20, 0
      %p104 = por %p102, %p103
      %p105 = scmp.ne.s32.totalorder %s93, %s94
      %p106 = scmp.eq.s32.totalorder %s21, 1
      %p107 = por %p105, %p106
      %p109 = scmp.ne.s32.totalorder %s94, %s108
      %p110 = scmp.eq.s32.totalorder %s21, 0
      %p111 = por %p109, %p110
      %s112 = ssub.s32 %s15, %s22
      %p113 = scmp.eq.s32.totalorder %s112, 0
      %s115 = sadd.s32 %s114, 1
      %s116 = scalar_select %p113, %s114, %s115
      %p119 = pneg %p113
      %p120 = scmp.eq.s32.totalorder %s15, 1
      %p121 = por %p119, %p120
      %p122 = scmp.ne.s32.totalorder %s114, %s117
      %p123 = scmp.eq.s32.totalorder %s15, 0
      %p124 = por %p122, %p123
      %p125 = scmp.ne.s32.totalorder %s114, %s117
      %p126 = scmp.eq.s32.totalorder %s20, 1
      %p127 = por %p125, %p126
      %p128 = scmp.ne.s32.totalorder %s117, %s118
      %p129 = scmp.eq.s32.totalorder %s20, 0
      %p130 = por %p128, %p129
      %p131 = scmp.ne.s32.totalorder %s117, %s118
      %p132 = scmp.eq.s32.totalorder %s21, 1
      %p133 = por %p131, %p132
      %p135 = scmp.ne.s32.totalorder %s118, %s134
      %p136 = scmp.eq.s32.totalorder %s21, 0
      %p137 = por %p135, %p136
      %p138 = scmp.le.s32.totalorder 1, %s15
      %p139 = scmp.lt.s32.totalorder %s15, 3
      %p140 = pnand %p138, %p139
      %p141 = pneg %p140
      // Predicated region
      $region9: #{tpu_custom_call.1} parent=5 // pred_check
        _
      $region10: #{tpu_custom_call.1} parent=5 // pred_check_branch
        %143 = sbr.rel (%p140) target = $region12
      $region11: #{tpu_custom_call.1} parent=5 // pred_region
        %s144 = ssub.s32 %s15, 1
        // Predicated region
        $region13: #{tpu_custom_call.1} parent=11 // pred_check
          %p145 = pneg %p62
        $region14: #{tpu_custom_call.1} parent=11 // pred_check_branch
          %147 = sbr.rel (%p145) target = $region16
        $region15: #{tpu_custom_call.1} parent=11 // pred_region
          _
        $region16: #{tpu_custom_call.1} parent=11 // pred_fallthru
          _
        // Predicated region
        $region17: #{tpu_custom_call.1} parent=11 // pred_check
          %p148 = pneg %p83
        $region18: #{tpu_custom_call.1} parent=11 // pred_check_branch
          %150 = sbr.rel (%p148) target = $region20
        $region19: #{tpu_custom_call.1} parent=11 // pred_region
          %s152 = ssub.s32 1536, 1536
          %153 = vsyncadd [#allocation4], %s152
          %s154 = sshll.u32 [#allocation3], 4
          %s155 = int_to_ptr.vmem [resolvable:$true] %s154
          %160 = dma.hbm_to_vmem [thread:$0]  %s2, 1536, %s155, [#allocation4], 128, 128, 8
        $region20: #{tpu_custom_call.1} parent=11 // pred_fallthru
          _
        // Predicated region
        $region21: #{tpu_custom_call.1} parent=11 // pred_check
          %p161 = pneg %p104
        $region22: #{tpu_custom_call.1} parent=11 // pred_check_branch
          %163 = sbr.rel (%p161) target = $region24
        $region23: #{tpu_custom_call.1} parent=11 // pred_region
          _
        $region24: #{tpu_custom_call.1} parent=11 // pred_fallthru
          _
      $region12: #{tpu_custom_call.1} parent=5 // pred_fallthru
        _
      %p164 = scmp.lt.s32.totalorder %s15, 2
      // Predicated region
      $region25: #{tpu_custom_call.1} parent=5 // pred_check
        %p165 = pneg %p164
      $region26: #{tpu_custom_call.1} parent=5 // pred_check_branch
        %167 = sbr.rel (%p165) target = $region28
      $region27: #{tpu_custom_call.1} parent=5 // pred_region
        // Predicated region
        $region29: #{tpu_custom_call.1} parent=27 // pred_check
          %p168 = pneg %p35
        $region30: #{tpu_custom_call.1} parent=27 // pred_check_branch
          %170 = sbr.rel (%p168) target = $region32
        $region31: #{tpu_custom_call.1} parent=27 // pred_region
          %s171 = smul.u32 2, %s15
          %p172 = scmp.lt.s32.totalorder %s171, 3
          %s173 = scalar_select %p172, %s171, 3
          %s174 = scalar_lea.vmem %s0, %s173
          %s175 = smul.u32 2, %s15
        $region32: #{tpu_custom_call.1} parent=27 // pred_fallthru
          _
      $region28: #{tpu_custom_call.1} parent=5 // pred_fallthru
        _
      %p176 = scmp.le.s32.totalorder 1, %s15
      %p177 = scmp.lt.s32.totalorder %s15, 3
      %p178 = pnand %p176, %p177
      %p179 = pneg %p178
      // Predicated region
      $region33: #{tpu_custom_call.1} parent=5 // pred_check
        _
      $region34: #{tpu_custom_call.1} parent=5 // pred_check_branch
        %181 = sbr.rel (%p178) target = $region36
      $region35: #{tpu_custom_call.1} parent=5 // pred_region
        %s182 = ssub.s32 %s15, 1
        // Predicated region
        $region37: #{tpu_custom_call.1} parent=35 // pred_check
          %p183 = pneg %p83
        $region38: #{tpu_custom_call.1} parent=35 // pred_check_branch
          %185 = sbr.rel (%p183) target = $region40
        $region39: #{tpu_custom_call.1} parent=35 // pred_region
          %186 = dma.done [#allocation4], 1536
        $region40: #{tpu_custom_call.1} parent=35 // pred_fallthru
          _
        %s187 = smul.u32 2, %s20
        %p188 = scmp.lt.s32.totalorder %s187, 3
        %s189 = scalar_select %p188, %s187, 3
        %s190 = scalar_lea.vmem %s0, %s189
        %p191 = pneg %p41
        %p192 = pneg %p38
        %p193 = pneg %p62
        %p194 = pneg %p59
        %p195 = pneg %p83
        %p196 = pneg %p80
        %p197 = pneg %p104
        %p198 = pneg %p101
        %p199 = pneg %p130
        %p200 = pneg %p127
        %s201 = sand.u32 %s117, 1
        %s202 = scalar_lea.sflag [#allocation5], %s201
        %s203 = sand.u32 %s117, 1
        %s204 = smul.addr %s203, 2
        %s205 = scalar_lea.vmem [#allocation6], %s204
        %s206 = smul.u32 2, %s20
        %p207 = scmp.lt.s32.totalorder %s206, 3
        %s208 = scalar_select %p207, %s206, 3
        %s209 = scalar_lea.vmem %s0, %s208
        %s210 = smul.u32 2, %s20
        %s211 = smul.u32 2, %s20
        %v213 = vld [vmem:[%s1] sm:$0xff]
        %v214 = vld [vmem:[%s1 + $0x8] sm:$0xff]
        %v215 = vld [vmem:[%s1 + $0x10] sm:$0xff]
        %v216 = vld [vmem:[%s1 + $0x18] sm:$0xff]
        %s217 = sld [smem:[#allocation2]]
        %v218 = vld [vmem:[%s209] sm:$0x1]
        %220 = vset.pattern.permute.xlu0 0
        %221 = vperm.xlu0 %220, %v213
        %v222 = vpop.permute.xlu0 %221
        %225 = vset.pattern.permute.xlu0 0
        %226 = vperm.xlu0 %225, %v214
        %v227 = vpop.permute.xlu0 %226
        %230 = vset.pattern.permute.xlu0 0
        %231 = vperm.xlu0 %230, %v215
        %v232 = vpop.permute.xlu0 %231
        %235 = vset.pattern.permute.xlu0 0
        %236 = vperm.xlu0 %235, %v216
        %v237 = vpop.permute.xlu0 %236
        %v240 = vlaneseq
        %v241 = vshrl.u32 %v240, 7
        %v242 = vsub.s32 0, %v241
        %v243 = vrot.slane %v218, %v242
        %v245 = vmul.f32 %v222, %v243
        %v246 = vmul.f32 %v227, %v243
        %v247 = vmul.f32 %v232, %v243
        %v248 = vmul.f32 %v237, %v243
        %249 = vset.pattern.permute.xlu0 1
        %250 = vperm.xlu0 %249, %v213
        %v251 = vpop.permute.xlu0 %250
        %253 = vset.pattern.permute.xlu0 1
        %254 = vperm.xlu0 %253, %v214
        %v255 = vpop.permute.xlu0 %254
        %257 = vset.pattern.permute.xlu0 1
        %258 = vperm.xlu0 %257, %v215
        %v259 = vpop.permute.xlu0 %258
        %261 = vset.pattern.permute.xlu0 1
        %262 = vperm.xlu0 %261, %v216
        %v263 = vpop.permute.xlu0 %262
        %v265 = vadd.f32 %v245, %v251
        %v266 = vadd.f32 %v246, %v255
        %v267 = vadd.f32 %v247, %v259
        %v268 = vadd.f32 %v248, %v263
        %v269 = vmul.f32 %v265, 0.5
        %v270 = vmul.f32 %v266, 0.5
        %v271 = vmul.f32 %v267, 0.5
        %v272 = vmul.f32 %v268, 0.5
        %v273 = vtanh.pop %v269
        %v274 = vtanh.pop %v270
        %v275 = vtanh.pop %v271
        %v276 = vtanh.pop %v272
        %v277 = vmul.f32 %v273, 0.5
        %v278 = vmul.f32 %v274, 0.5
        %v279 = vmul.f32 %v275, 0.5
        %v280 = vmul.f32 %v276, 0.5
        %v281 = vadd.f32 %v277, 0.5
        %v282 = vadd.f32 %v278, 0.5
        %v283 = vadd.f32 %v279, 0.5
        %v284 = vadd.f32 %v280, 0.5
        %v285 = vld [vmem:[%s209 + $0x1] sm:$0x1]
        %v287 = vlaneseq
        %v288 = vshrl.u32 %v287, 7
        %v289 = vsub.s32 0, %v288
        %v290 = vrot.slane %v285, %v289
        %v292 = vmul.f32 %v222, %v290
        %v293 = vmul.f32 %v227, %v290
        %v294 = vmul.f32 %v232, %v290
        %v295 = vmul.f32 %v237, %v290
        %v296 = vadd.f32 %v292, %v251
        %v297 = vadd.f32 %v293, %v255
        %v298 = vadd.f32 %v294, %v259
        %v299 = vadd.f32 %v295, %v263
        %v300 = vmul.f32 %v296, 0.5
        %v301 = vmul.f32 %v297, 0.5
        %v302 = vmul.f32 %v298, 0.5
        %v303 = vmul.f32 %v299, 0.5
        %v304 = vtanh.pop %v300
        %v305 = vtanh.pop %v301
        %v306 = vtanh.pop %v302
        %v307 = vtanh.pop %v303
        %v308 = vmul.f32 %v304, 0.5
        %v309 = vmul.f32 %v305, 0.5
        %v310 = vmul.f32 %v306, 0.5
        %v311 = vmul.f32 %v307, 0.5
        %v312 = vadd.f32 %v308, 0.5
        %v313 = vadd.f32 %v309, 0.5
        %v314 = vadd.f32 %v310, 0.5
        %v315 = vadd.f32 %v311, 0.5
        %v316 = vld [vmem:[#allocation3] sm:$0xff]
        %v317 = vld [vmem:[#allocation3 + $0x8] sm:$0xff]
        %v318 = vld [vmem:[#allocation3 + $0x10] sm:$0xff]
        %v319 = vld [vmem:[#allocation3 + $0x18] sm:$0xff]
        %v320 = vpack.c.bf16 %v317, %v316
        %v321 = vpack.c.bf16 %v319, %v318
        %v322 = vpack.c.bf16 %v282, %v281
        %v323 = vpack.c.bf16 %v284, %v283
        %324 = vset.pattern.permute.xlu0 3
        %325 = vperm.xlu0 %324, %v213
        %v326 = vpop.permute.xlu0 %325
        %328 = vset.pattern.permute.xlu0 3
        %329 = vperm.xlu0 %328, %v214
        %v330 = vpop.permute.xlu0 %329
        %332 = vset.pattern.permute.xlu0 3
        %333 = vperm.xlu0 %332, %v215
        %v334 = vpop.permute.xlu0 %333
        %336 = vset.pattern.permute.xlu0 3
        %337 = vperm.xlu0 %336, %v216
        %v338 = vpop.permute.xlu0 %337
        %vm340 = vcmask 261120
        %v342 = vsel %vm340, %v320, 0
        %v345 = vsel %vm340, %v321, 0
        %347 = vmatprep.subr.bf16.mxu0 0
        %348 = vmatpush1.bf16.msra.mxu0 0
        %349 = vmatprep.subr.bf16.mxu0 0
        %350 = vmatpush1.bf16.msra.mxu0 0
        %351 = vmatprep.subr.bf16.mxu0 0
        %352 = vmatpush1.bf16.msra.mxu0 0
        %353 = vmatprep.subr.bf16.mxu0 0
        %354 = vmatpush1.bf16.msra.mxu0 0
        %355 = vmatprep.subr.bf16.mxu0 0
        %356 = vmatpush1.bf16.msra.mxu0 0
        %357 = vmatprep.subr.bf16.mxu0 0
        %358 = vmatpush1.bf16.msra.mxu0 0
        %359 = vmatprep.subr.bf16.mxu0 0
        %360 = vmatpush1.bf16.msra.mxu0 %v323
        %361 = vmatprep.subr.bf16.mxu0 0
        %362 = vmatpush1.bf16.msra.mxu0 %v322
        %363 = vmatprep.subr.bf16.mxu0 0
        %364 = vmatpush2.bf16.msra.mxu0 0
        %365 = vmatprep.subr.bf16.mxu0 0
        %366 = vmatpush2.bf16.msra.mxu0 0
        %367 = vmatprep.subr.bf16.mxu0 0
        %368 = vmatpush2.bf16.msra.mxu0 0
        %369 = vmatprep.subr.bf16.mxu0 0
        %370 = vmatpush2.bf16.msra.mxu0 0
        %371 = vmatprep.subr.bf16.mxu0 0
        %372 = vmatpush2.bf16.msra.mxu0 0
        %373 = vmatprep.subr.bf16.mxu0 0
        %374 = vmatpush2.bf16.msra.mxu0 0
        %375 = vmatprep.subr.bf16.mxu0 0
        %376 = vmatpush2.bf16.msra.mxu0 0
        %377 = vmatprep.subr.bf16.mxu0 0
        %378 = vmatpush2.bf16.msra.mxu0 0
        %379 = vmatprep.mubr.bf16.mxu0 0
        %380 = vmatmul.mubr.bf16.gmra.mxu0 %v342
        %v381 = vpop.f32.mrf.mxu0
        %v382 = vadd.f32 %v326, %v381
        %v383 = vpop.f32.mrf.mxu0
        %v384 = vpop.f32.mrf.mxu0
        %v385 = vadd.f32 %v330, %v384
        %v386 = vpop.f32.mrf.mxu0
        %387 = vmatprep.mubr.bf16.mxu0 0
        %388 = vmatmul.mubr.bf16.gmra.mxu0 %v345
        %v389 = vpop.f32.mrf.mxu0
        %v390 = vadd.f32 %v334, %v389
        %v391 = vpop.f32.mrf.mxu0
        %v392 = vpop.f32.mrf.mxu0
        %v393 = vadd.f32 %v338, %v392
        %v394 = vpop.f32.mrf.mxu0
        %395 = vdwg.mxu0
        %v396 = vpack.c.bf16 %v313, %v312
        %v397 = vpack.c.bf16 %v315, %v314
        %398 = vmatprep.subr.bf16.mxu0 0
        %399 = vmatpush1.bf16.msra.mxu0 0
        %400 = vmatprep.subr.bf16.mxu0 0
        %401 = vmatpush1.bf16.msra.mxu0 0
        %402 = vmatprep.subr.bf16.mxu0 0
        %403 = vmatpush1.bf16.msra.mxu0 0
        %404 = vmatprep.subr.bf16.mxu0 0
        %405 = vmatpush1.bf16.msra.mxu0 0
        %406 = vmatprep.subr.bf16.mxu0 0
        %407 = vmatpush1.bf16.msra.mxu0 0
        %408 = vmatprep.subr.bf16.mxu0 0
        %409 = vmatpush1.bf16.msra.mxu0 0
        %410 = vmatprep.subr.bf16.mxu0 0
        %411 = vmatpush1.bf16.msra.mxu0 %v397
        %412 = vmatprep.subr.bf16.mxu0 0
        %413 = vmatpush1.bf16.msra.mxu0 %v396
        %414 = vmatprep.subr.bf16.mxu0 0
        %415 = vmatpush2.bf16.msra.mxu0 0
        %416 = vmatprep.subr.bf16.mxu0 0
        %417 = vmatpush2.bf16.msra.mxu0 0
        %418 = vmatprep.subr.bf16.mxu0 0
        %419 = vmatpush2.bf16.msra.mxu0 0
        %420 = vmatprep.subr.bf16.mxu0 0
        %421 = vmatpush2.bf16.msra.mxu0 0
        %422 = vmatprep.subr.bf16.mxu0 0
        %423 = vmatpush2.bf16.msra.mxu0 0
        %424 = vmatprep.subr.bf16.mxu0 0
        %425 = vmatpush2.bf16.msra.mxu0 0
        %426 = vmatprep.subr.bf16.mxu0 0
        %427 = vmatpush2.bf16.msra.mxu0 0
        %428 = vmatprep.subr.bf16.mxu0 0
        %429 = vmatpush2.bf16.msra.mxu0 0
        %430 = vmatprep.mubr.bf16.mxu0 0
        %431 = vmatmul.mubr.bf16.gmra.mxu0 %v342
        %v432 = vpop.f32.mrf.mxu0
        %v433 = vadd.f32 %v326, %v432
        %v434 = vpop.f32.mrf.mxu0
        %v435 = vpop.f32.mrf.mxu0
        %v436 = vadd.f32 %v330, %v435
        %v437 = vpop.f32.mrf.mxu0
        %438 = vmatprep.mubr.bf16.mxu0 0
        %439 = vmatmul.mubr.bf16.gmra.mxu0 %v345
        %v440 = vpop.f32.mrf.mxu0
        %v441 = vadd.f32 %v334, %v440
        %v442 = vpop.f32.mrf.mxu0
        %v443 = vpop.f32.mrf.mxu0
        %v444 = vadd.f32 %v338, %v443
        %v445 = vpop.f32.mrf.mxu0
        %446 = vdwg.mxu0
        %v447 = vmul.f32 %v382, 0.5
        %v448 = vmul.f32 %v385, 0.5
        %v449 = vmul.f32 %v390, 0.5
        %v450 = vmul.f32 %v393, 0.5
        %v451 = vtanh.pop %v447
        %v452 = vtanh.pop %v448
        %v453 = vtanh.pop %v449
        %v454 = vtanh.pop %v450
        %v455 = vmul.f32 %v451, 0.5
        %v456 = vmul.f32 %v452, 0.5
        %v457 = vmul.f32 %v453, 0.5
        %v458 = vmul.f32 %v454, 0.5
        %v459 = vadd.f32 %v455, 0.5
        %v460 = vadd.f32 %v456, 0.5
        %v461 = vadd.f32 %v457, 0.5
        %v462 = vadd.f32 %v458, 0.5
        %v463 = vadd.f32 %v281, %v459
        %v464 = vadd.f32 %v282, %v460
        %v465 = vadd.f32 %v283, %v461
        %v466 = vadd.f32 %v284, %v462
        %v467 = vmul.f32 %v433, 0.5
        %v468 = vmul.f32 %v436, 0.5
        %v469 = vmul.f32 %v441, 0.5
        %v470 = vmul.f32 %v444, 0.5
        %v471 = vtanh.pop %v467
        %v472 = vtanh.pop %v468
        %v473 = vtanh.pop %v469
        %v474 = vtanh.pop %v470
        %v475 = vmul.f32 %v471, 0.5
        %v476 = vmul.f32 %v472, 0.5
        %v477 = vmul.f32 %v473, 0.5
        %v478 = vmul.f32 %v474, 0.5
        %v479 = vadd.f32 %v475, 0.5
        %v480 = vadd.f32 %v476, 0.5
        %v481 = vadd.f32 %v477, 0.5
        %v482 = vadd.f32 %v478, 0.5
        %v483 = vadd.f32 %v312, %v479
        %v484 = vadd.f32 %v313, %v480
        %v485 = vadd.f32 %v314, %v481
        %v486 = vadd.f32 %v315, %v482
        %s487 = scalar_lea.vmem [#allocation3], 32
        %v488 = vld [vmem:[%s487] sm:$0xff]
        %v489 = vld [vmem:[%s487 + $0x8] sm:$0xff]
        %v490 = vld [vmem:[%s487 + $0x10] sm:$0xff]
        %v491 = vld [vmem:[%s487 + $0x18] sm:$0xff]
        %v492 = vpack.c.bf16 %v489, %v488
        %v493 = vpack.c.bf16 %v491, %v490
        %v494 = vpack.c.bf16 %v464, %v463
        %v495 = vpack.c.bf16 %v466, %v465
        %496 = vset.pattern.permute.xlu0 4
        %497 = vperm.xlu0 %496, %v213
        %v498 = vpop.permute.xlu0 %497
        %500 = vset.pattern.permute.xlu0 4
        %501 = vperm.xlu0 %500, %v214
        %v502 = vpop.permute.xlu0 %501
        %504 = vset.pattern.permute.xlu0 4
        %505 = vperm.xlu0 %504, %v215
        %v506 = vpop.permute.xlu0 %505
        %508 = vset.pattern.permute.xlu0 4
        %509 = vperm.xlu0 %508, %v216
        %v510 = vpop.permute.xlu0 %509
        %v513 = vsel %vm340, %v492, 0
        %v516 = vsel %vm340, %v493, 0
        %518 = vmatprep.subr.bf16.mxu0 0
        %519 = vmatpush1.bf16.msra.mxu0 0
        %520 = vmatprep.subr.bf16.mxu0 0
        %521 = vmatpush1.bf16.msra.mxu0 0
        %522 = vmatprep.subr.bf16.mxu0 0
        %523 = vmatpush1.bf16.msra.mxu0 0
        %524 = vmatprep.subr.bf16.mxu0 0
        %525 = vmatpush1.bf16.msra.mxu0 0
        %526 = vmatprep.subr.bf16.mxu0 0
        %527 = vmatpush1.bf16.msra.mxu0 0
        %528 = vmatprep.subr.bf16.mxu0 0
        %529 = vmatpush1.bf16.msra.mxu0 0
        %530 = vmatprep.subr.bf16.mxu0 0
        %531 = vmatpush1.bf16.msra.mxu0 %v495
        %532 = vmatprep.subr.bf16.mxu0 0
        %533 = vmatpush1.bf16.msra.mxu0 %v494
        %534 = vmatprep.subr.bf16.mxu0 0
        %535 = vmatpush2.bf16.msra.mxu0 0
        %536 = vmatprep.subr.bf16.mxu0 0
        %537 = vmatpush2.bf16.msra.mxu0 0
        %538 = vmatprep.subr.bf16.mxu0 0
        %539 = vmatpush2.bf16.msra.mxu0 0
        %540 = vmatprep.subr.bf16.mxu0 0
        %541 = vmatpush2.bf16.msra.mxu0 0
        %542 = vmatprep.subr.bf16.mxu0 0
        %543 = vmatpush2.bf16.msra.mxu0 0
        %544 = vmatprep.subr.bf16.mxu0 0
        %545 = vmatpush2.bf16.msra.mxu0 0
        %546 = vmatprep.subr.bf16.mxu0 0
        %547 = vmatpush2.bf16.msra.mxu0 0
        %548 = vmatprep.subr.bf16.mxu0 0
        %549 = vmatpush2.bf16.msra.mxu0 0
        %550 = vmatprep.mubr.bf16.mxu0 0
        %551 = vmatmul.mubr.bf16.gmra.mxu0 %v513
        %v552 = vpop.f32.mrf.mxu0
        %v553 = vadd.f32 %v498, %v552
        %v554 = vpop.f32.mrf.mxu0
        %v555 = vpop.f32.mrf.mxu0
        %v556 = vadd.f32 %v502, %v555
        %v557 = vpop.f32.mrf.mxu0
        %558 = vmatprep.mubr.bf16.mxu0 0
        %559 = vmatmul.mubr.bf16.gmra.mxu0 %v516
        %v560 = vpop.f32.mrf.mxu0
        %v561 = vadd.f32 %v506, %v560
        %v562 = vpop.f32.mrf.mxu0
        %v563 = vpop.f32.mrf.mxu0
        %v564 = vadd.f32 %v510, %v563
        %v565 = vpop.f32.mrf.mxu0
        %566 = vdwg.mxu0
        %v567 = vpack.c.bf16 %v484, %v483
        %v568 = vpack.c.bf16 %v486, %v485
        %569 = vmatprep.subr.bf16.mxu0 0
        %570 = vmatpush1.bf16.msra.mxu0 0
        %571 = vmatprep.subr.bf16.mxu0 0
        %572 = vmatpush1.bf16.msra.mxu0 0
        %573 = vmatprep.subr.bf16.mxu0 0
        %574 = vmatpush1.bf16.msra.mxu0 0
        %575 = vmatprep.subr.bf16.mxu0 0
        %576 = vmatpush1.bf16.msra.mxu0 0
        %577 = vmatprep.subr.bf16.mxu0 0
        %578 = vmatpush1.bf16.msra.mxu0 0
        %579 = vmatprep.subr.bf16.mxu0 0
        %580 = vmatpush1.bf16.msra.mxu0 0
        %581 = vmatprep.subr.bf16.mxu0 0
        %582 = vmatpush1.bf16.msra.mxu0 %v568
        %583 = vmatprep.subr.bf16.mxu0 0
        %584 = vmatpush1.bf16.msra.mxu0 %v567
        %585 = vmatprep.subr.bf16.mxu0 0
        %586 = vmatpush2.bf16.msra.mxu0 0
        %587 = vmatprep.subr.bf16.mxu0 0
        %588 = vmatpush2.bf16.msra.mxu0 0
        %589 = vmatprep.subr.bf16.mxu0 0
        %590 = vmatpush2.bf16.msra.mxu0 0
        %591 = vmatprep.subr.bf16.mxu0 0
        %592 = vmatpush2.bf16.msra.mxu0 0
        %593 = vmatprep.subr.bf16.mxu0 0
        %594 = vmatpush2.bf16.msra.mxu0 0
        %595 = vmatprep.subr.bf16.mxu0 0
        %596 = vmatpush2.bf16.msra.mxu0 0
        %597 = vmatprep.subr.bf16.mxu0 0
        %598 = vmatpush2.bf16.msra.mxu0 0
        %599 = vmatprep.subr.bf16.mxu0 0
        %600 = vmatpush2.bf16.msra.mxu0 0
        %601 = vmatprep.mubr.bf16.mxu0 0
        %602 = vmatmul.mubr.bf16.gmra.mxu0 %v513
        %v603 = vpop.f32.mrf.mxu0
        %v604 = vadd.f32 %v498, %v603
        %v605 = vpop.f32.mrf.mxu0
        %v606 = vpop.f32.mrf.mxu0
        %v607 = vadd.f32 %v502, %v606
        %v608 = vpop.f32.mrf.mxu0
        %609 = vmatprep.mubr.bf16.mxu0 0
        %610 = vmatmul.mubr.bf16.gmra.mxu0 %v516
        %v611 = vpop.f32.mrf.mxu0
        %v612 = vadd.f32 %v506, %v611
        %v613 = vpop.f32.mrf.mxu0
        %v614 = vpop.f32.mrf.mxu0
        %v615 = vadd.f32 %v510, %v614
        %v616 = vpop.f32.mrf.mxu0
        %617 = vdwg.mxu0
        %v618 = vmul.f32 %v553, 0.5
        %v619 = vmul.f32 %v556, 0.5
        %v620 = vmul.f32 %v561, 0.5
        %v621 = vmul.f32 %v564, 0.5
        %v622 = vtanh.pop %v618
        %v623 = vtanh.pop %v619
        %v624 = vtanh.pop %v620
        %v625 = vtanh.pop %v621
        %v626 = vmul.f32 %v622, 0.5
        %v627 = vmul.f32 %v623, 0.5
        %v628 = vmul.f32 %v624, 0.5
        %v629 = vmul.f32 %v625, 0.5
        %v630 = vadd.f32 %v626, 0.5
        %v631 = vadd.f32 %v627, 0.5
        %v632 = vadd.f32 %v628, 0.5
        %v633 = vadd.f32 %v629, 0.5
        %v634 = vadd.f32 %v463, %v630
        %v635 = vadd.f32 %v464, %v631
        %v636 = vadd.f32 %v465, %v632
        %v637 = vadd.f32 %v466, %v633
        %v638 = vmul.f32 %v604, 0.5
        %v639 = vmul.f32 %v607, 0.5
        %v640 = vmul.f32 %v612, 0.5
        %v641 = vmul.f32 %v615, 0.5
        %v642 = vtanh.pop %v638
        %v643 = vtanh.pop %v639
        %v644 = vtanh.pop %v640
        %v645 = vtanh.pop %v641
        %v646 = vmul.f32 %v642, 0.5
        %v647 = vmul.f32 %v643, 0.5
        %v648 = vmul.f32 %v644, 0.5
        %v649 = vmul.f32 %v645, 0.5
        %v650 = vadd.f32 %v646, 0.5
        %v651 = vadd.f32 %v647, 0.5
        %v652 = vadd.f32 %v648, 0.5
        %v653 = vadd.f32 %v649, 0.5
        %v654 = vadd.f32 %v483, %v650
        %v655 = vadd.f32 %v484, %v651
        %v656 = vadd.f32 %v485, %v652
        %v657 = vadd.f32 %v486, %v653
        %s658 = scalar_lea.vmem [#allocation3], 64
        %v659 = vld [vmem:[%s658] sm:$0xff]
        %v660 = vld [vmem:[%s658 + $0x8] sm:$0xff]
        %v661 = vld [vmem:[%s658 + $0x10] sm:$0xff]
        %v662 = vld [vmem:[%s658 + $0x18] sm:$0xff]
        %v663 = vpack.c.bf16 %v660, %v659
        %v664 = vpack.c.bf16 %v662, %v661
        %v665 = vpack.c.bf16 %v635, %v634
        %v666 = vpack.c.bf16 %v637, %v636
        %667 = vset.pattern.permute.xlu0 5
        %668 = vperm.xlu0 %667, %v213
        %v669 = vpop.permute.xlu0 %668
        %671 = vset.pattern.permute.xlu0 5
        %672 = vperm.xlu0 %671, %v214
        %v673 = vpop.permute.xlu0 %672
        %675 = vset.pattern.permute.xlu0 5
        %676 = vperm.xlu0 %675, %v215
        %v677 = vpop.permute.xlu0 %676
        %679 = vset.pattern.permute.xlu0 5
        %680 = vperm.xlu0 %679, %v216
        %v681 = vpop.permute.xlu0 %680
        %v684 = vsel %vm340, %v663, 0
        %v687 = vsel %vm340, %v664, 0
        %689 = vmatprep.subr.bf16.mxu0 0
        %690 = vmatpush1.bf16.msra.mxu0 0
        %691 = vmatprep.subr.bf16.mxu0 0
        %692 = vmatpush1.bf16.msra.mxu0 0
        %693 = vmatprep.subr.bf16.mxu0 0
        %694 = vmatpush1.bf16.msra.mxu0 0
        %695 = vmatprep.subr.bf16.mxu0 0
        %696 = vmatpush1.bf16.msra.mxu0 0
        %697 = vmatprep.subr.bf16.mxu0 0
        %698 = vmatpush1.bf16.msra.mxu0 0
        %699 = vmatprep.subr.bf16.mxu0 0
        %700 = vmatpush1.bf16.msra.mxu0 0
        %701 = vmatprep.subr.bf16.mxu0 0
        %702 = vmatpush1.bf16.msra.mxu0 %v666
        %703 = vmatprep.subr.bf16.mxu0 0
        %704 = vmatpush1.bf16.msra.mxu0 %v665
        %705 = vmatprep.subr.bf16.mxu0 0
        %706 = vmatpush2.bf16.msra.mxu0 0
        %707 = vmatprep.subr.bf16.mxu0 0
        %708 = vmatpush2.bf16.msra.mxu0 0
        %709 = vmatprep.subr.bf16.mxu0 0
        %710 = vmatpush2.bf16.msra.mxu0 0
        %711 = vmatprep.subr.bf16.mxu0 0
        %712 = vmatpush2.bf16.msra.mxu0 0
        %713 = vmatprep.subr.bf16.mxu0 0
        %714 = vmatpush2.bf16.msra.mxu0 0
        %715 = vmatprep.subr.bf16.mxu0 0
        %716 = vmatpush2.bf16.msra.mxu0 0
        %717 = vmatprep.subr.bf16.mxu0 0
        %718 = vmatpush2.bf16.msra.mxu0 0
        %719 = vmatprep.subr.bf16.mxu0 0
        %720 = vmatpush2.bf16.msra.mxu0 0
        %721 = vmatprep.mubr.bf16.mxu0 0
        %722 = vmatmul.mubr.bf16.gmra.mxu0 %v684
        %v723 = vpop.f32.mrf.mxu0
        %v724 = vadd.f32 %v669, %v723
        %v725 = vpop.f32.mrf.mxu0
        %v726 = vpop.f32.mrf.mxu0
        %v727 = vadd.f32 %v673, %v726
        %v728 = vpop.f32.mrf.mxu0
        %729 = vmatprep.mubr.bf16.mxu0 0
        %730 = vmatmul.mubr.bf16.gmra.mxu0 %v687
        %v731 = vpop.f32.mrf.mxu0
        %v732 = vadd.f32 %v677, %v731
        %v733 = vpop.f32.mrf.mxu0
        %v734 = vpop.f32.mrf.mxu0
        %v735 = vadd.f32 %v681, %v734
        %v736 = vpop.f32.mrf.mxu0
        %737 = vdwg.mxu0
        %v738 = vpack.c.bf16 %v655, %v654
        %v739 = vpack.c.bf16 %v657, %v656
        %740 = vmatprep.subr.bf16.mxu0 0
        %741 = vmatpush1.bf16.msra.mxu0 0
        %742 = vmatprep.subr.bf16.mxu0 0
        %743 = vmatpush1.bf16.msra.mxu0 0
        %744 = vmatprep.subr.bf16.mxu0 0
        %745 = vmatpush1.bf16.msra.mxu0 0
        %746 = vmatprep.subr.bf16.mxu0 0
        %747 = vmatpush1.bf16.msra.mxu0 0
        %748 = vmatprep.subr.bf16.mxu0 0
        %749 = vmatpush1.bf16.msra.mxu0 0
        %750 = vmatprep.subr.bf16.mxu0 0
        %751 = vmatpush1.bf16.msra.mxu0 0
        %752 = vmatprep.subr.bf16.mxu0 0
        %753 = vmatpush1.bf16.msra.mxu0 %v739
        %754 = vmatprep.subr.bf16.mxu0 0
        %755 = vmatpush1.bf16.msra.mxu0 %v738
        %756 = vmatprep.subr.bf16.mxu0 0
        %757 = vmatpush2.bf16.msra.mxu0 0
        %758 = vmatprep.subr.bf16.mxu0 0
        %759 = vmatpush2.bf16.msra.mxu0 0
        %760 = vmatprep.subr.bf16.mxu0 0
        %761 = vmatpush2.bf16.msra.mxu0 0
        %762 = vmatprep.subr.bf16.mxu0 0
        %763 = vmatpush2.bf16.msra.mxu0 0
        %764 = vmatprep.subr.bf16.mxu0 0
        %765 = vmatpush2.bf16.msra.mxu0 0
        %766 = vmatprep.subr.bf16.mxu0 0
        %767 = vmatpush2.bf16.msra.mxu0 0
        %768 = vmatprep.subr.bf16.mxu0 0
        %769 = vmatpush2.bf16.msra.mxu0 0
        %770 = vmatprep.subr.bf16.mxu0 0
        %771 = vmatpush2.bf16.msra.mxu0 0
        %772 = vmatprep.mubr.bf16.mxu0 0
        %773 = vmatmul.mubr.bf16.gmra.mxu0 %v684
        %v774 = vpop.f32.mrf.mxu0
        %v775 = vadd.f32 %v669, %v774
        %v776 = vpop.f32.mrf.mxu0
        %v777 = vpop.f32.mrf.mxu0
        %v778 = vadd.f32 %v673, %v777
        %v779 = vpop.f32.mrf.mxu0
        %780 = vmatprep.mubr.bf16.mxu0 0
        %781 = vmatmul.mubr.bf16.gmra.mxu0 %v687
        %v782 = vpop.f32.mrf.mxu0
        %v783 = vadd.f32 %v677, %v782
        %v784 = vpop.f32.mrf.mxu0
        %v785 = vpop.f32.mrf.mxu0
        %v786 = vadd.f32 %v681, %v785
        %v787 = vpop.f32.mrf.mxu0
        %788 = vdwg.mxu0
        %v789 = vmul.f32 %v724, 0.5
        %v790 = vmul.f32 %v727, 0.5
        %v791 = vmul.f32 %v732, 0.5
        %v792 = vmul.f32 %v735, 0.5
        %v793 = vtanh.pop %v789
        %v794 = vtanh.pop %v790
        %v795 = vtanh.pop %v791
        %v796 = vtanh.pop %v792
        %v797 = vmul.f32 %v793, 0.5
        %v798 = vmul.f32 %v794, 0.5
        %v799 = vmul.f32 %v795, 0.5
        %v800 = vmul.f32 %v796, 0.5
        %v801 = vadd.f32 %v797, 0.5
        %v802 = vadd.f32 %v798, 0.5
        %v803 = vadd.f32 %v799, 0.5
        %v804 = vadd.f32 %v800, 0.5
        %v805 = vadd.f32 %v634, %v801
        %v806 = vadd.f32 %v635, %v802
        %v807 = vadd.f32 %v636, %v803
        %v808 = vadd.f32 %v637, %v804
        %v809 = vmul.f32 %v775, 0.5
        %v810 = vmul.f32 %v778, 0.5
        %v811 = vmul.f32 %v783, 0.5
        %v812 = vmul.f32 %v786, 0.5
        %v813 = vtanh.pop %v809
        %v814 = vtanh.pop %v810
        %v815 = vtanh.pop %v811
        %v816 = vtanh.pop %v812
        %v817 = vmul.f32 %v813, 0.5
        %v818 = vmul.f32 %v814, 0.5
        %v819 = vmul.f32 %v815, 0.5
        %v820 = vmul.f32 %v816, 0.5
        %v821 = vadd.f32 %v817, 0.5
        %v822 = vadd.f32 %v818, 0.5
        %v823 = vadd.f32 %v819, 0.5
        %v824 = vadd.f32 %v820, 0.5
        %v825 = vadd.f32 %v654, %v821
        %v826 = vadd.f32 %v655, %v822
        %v827 = vadd.f32 %v656, %v823
        %v828 = vadd.f32 %v657, %v824
        %829 = vset.pattern.permute.xlu0 2
        %830 = vperm.xlu0 %829, %v213
        %v831 = vpop.permute.xlu0 %830
        %833 = vset.pattern.permute.xlu0 2
        %834 = vperm.xlu0 %833, %v214
        %v835 = vpop.permute.xlu0 %834
        %837 = vset.pattern.permute.xlu0 2
        %838 = vperm.xlu0 %837, %v215
        %v839 = vpop.permute.xlu0 %838
        %841 = vset.pattern.permute.xlu0 2
        %842 = vperm.xlu0 %841, %v216
        %v843 = vpop.permute.xlu0 %842
        %v845 = vmul.f32 %v831, %v805
        %v846 = vmul.f32 %v835, %v806
        %v847 = vmul.f32 %v839, %v807
        %v848 = vmul.f32 %v843, %v808
        %v849 = vadd.f32 %v845, %v846
        %v850 = vadd.f32 %v849, %v847
        %v851 = vadd.f32 %v850, %v848
        %v852 = vrot.slane %v851, 4
        %v853 = vadd.f32 %v851, %v852
        %v854 = vrot.slane %v853, 2
        %v855 = vadd.f32 %v853, %v854
        %v856 = vrot.slane %v855, 1
        %v857 = vadd.f32 %v855, %v856
        %v858 = vstv %s217
        %v859 = vadd.f32 %v857, %v858
        %v860 = vlaneseq
        %vm861 = vcmp.ge.s32.totalorder %v860, 0
        %vm862 = vcmp.lt.s32.totalorder %v860, 128
        %vm863 = vmand %vm861, %vm862
        %864 = vst.msk [vmem:[%s205] sm:$0x1] %vm863, %v859
        %v865 = vmul.f32 %v831, %v825
        %v866 = vmul.f32 %v835, %v826
        %v867 = vmul.f32 %v839, %v827
        %v868 = vmul.f32 %v843, %v828
        %v869 = vadd.f32 %v865, %v866
        %v870 = vadd.f32 %v869, %v867
        %v871 = vadd.f32 %v870, %v868
        %v872 = vrot.slane %v871, 4
        %v873 = vadd.f32 %v871, %v872
        %v874 = vrot.slane %v873, 2
        %v875 = vadd.f32 %v873, %v874
        %v876 = vrot.slane %v875, 1
        %v877 = vadd.f32 %v875, %v876
        %v878 = vadd.f32 %v877, %v858
        %879 = vst.msk [vmem:[%s205 + $0x1] sm:$0x1] %vm863, %v878
        %s880 = sand.u32 %s117, 1
        %s881 = scalar_lea.sflag [#allocation5], %s880
        %s882 = sand.u32 %s117, 1
        %s883 = smul.addr %s882, 2
        %s884 = scalar_lea.vmem [#allocation6], %s883
        // Predicated region
        $region41: #{tpu_custom_call.1} parent=35 // pred_check
          %p885 = pneg %p127
        $region42: #{tpu_custom_call.1} parent=35 // pred_check_branch
          %887 = sbr.rel (%p885) target = $region44
        $region43: #{tpu_custom_call.1} parent=35 // pred_region
          %s888 = smul.u32 2, %s20
          %s890 = ssub.s32 32, 32
          %891 = vsyncadd %s881, %s890
          %s892 = smul.addr %s888, 16
          %s893 = scalar_lea.hbm %s4, %s892
          %s895 = sshll.u32 %s884, 4
          %s896 = int_to_ptr.vmem [resolvable:$true] %s895
          %898 = dma.vmem_to_hbm [thread:$0]  %s896, 32, %s893, %s881
        $region44: #{tpu_custom_call.1} parent=35 // pred_fallthru
          _
      $region36: #{tpu_custom_call.1} parent=5 // pred_fallthru
        _
      %p899 = scmp.le.s32.totalorder 2, %s15
      // Predicated region
      $region45: #{tpu_custom_call.1} parent=5 // pred_check
        %p900 = pneg %p899
      $region46: #{tpu_custom_call.1} parent=5 // pred_check_branch
        %902 = sbr.rel (%p900) target = $region48
      $region47: #{tpu_custom_call.1} parent=5 // pred_region
        %s903 = ssub.s32 %s15, 2
        // Predicated region
        $region49: #{tpu_custom_call.1} parent=47 // pred_check
          %p904 = pneg %p133
        $region50: #{tpu_custom_call.1} parent=47 // pred_check_branch
          %906 = sbr.rel (%p904) target = $region52
        $region51: #{tpu_custom_call.1} parent=47 // pred_region
          %s907 = sand.u32 %s118, 1
          %s908 = scalar_lea.sflag [#allocation5], %s907
          %s909 = sand.u32 %s118, 1
          %s910 = smul.addr %s909, 2
          %s911 = scalar_lea.vmem [#allocation6], %s910
          %912 = dma.done %s908, 32
        $region52: #{tpu_custom_call.1} parent=47 // pred_fallthru
          _
      $region48: #{tpu_custom_call.1} parent=5 // pred_fallthru
        _
    $region6: #{tpu_custom_call.1} parent=1 // loop_footer
      %s19 = sadd.s32 1, %s15
    $region7: #{tpu_custom_call.1} parent=1 // loop_footer_branch
      %14 = sbr.rel target = $region3
    $region8: #{tpu_custom_call.1} parent=1 // loop_exit
      _
    %913 = vsyncpa [#allocation4], 1
    %s914 = scalar_lea.sflag [#allocation4], 1
    %915 = vsyncpa %s914, 1
    %916 = vsyncpa [#allocation5], 1
    %s917 = scalar_lea.sflag [#allocation5], 1
    %918 = vsyncpa %s917, 1

</llo_original>
